<compile_context>
chip_gen: v5e
topology: v5e:2x2
jax: 0.10.0
libtpu: 0.0.40
codegen_flags: <defaults>
</compile_context>

<pallas_src>
import math

import jax
import jax.numpy as jnp
import numpy as np
from jax.experimental import pallas as pl
from jax.experimental.pallas import tpu as pltpu

LANES = 128        # vreg lane width
SUBLANES = 8       # f32 vreg sublane count
MAX_BLOCK_ROWS = 512   # 512 rows * 128 lanes = 64K batch elements per grid step


def _round_up(x, m):
    return ((x + m - 1) // m) * m


def encoder_kernel(x_ref, p_ref, out_ref):
    # x_ref:   (T, 2, Rblk, 128) in VMEM (time, coord, sublane-row-block, lane); f32 or bf16.
    # p_ref:   (10,) f32 in SMEM: [w00, w01, w10, w11, u00, u01, u10, u11, b0, b1]
    #          where u = W_hh and b = b_ih + b_hh (biases pre-combined, valid for all steps).
    # out_ref: (2, Rblk, 128) in VMEM (hidden unit, sublane-row-block, lane).
    T = x_ref.shape[0]

    # Loop-invariant SMEM scalar reads hoisted above the unrolled time loop.
    w00 = p_ref[0]; w01 = p_ref[1]; w10 = p_ref[2]; w11 = p_ref[3]
    u00 = p_ref[4]; u01 = p_ref[5]; u10 = p_ref[6]; u11 = p_ref[7]
    b0 = p_ref[8]; b1 = p_ref[9]

    # ---- t = 0 peeled: hidden is zero, so the h*W_hh terms vanish. ----
    xc = x_ref[0, 0].astype(jnp.float32)   # (Rblk, 128)
    yc = x_ref[0, 1].astype(jnp.float32)
    h0 = jnp.tanh(xc * w00 + yc * w01 + b0)   # EUP
    h1 = jnp.tanh(xc * w10 + yc * w11 + b1)

    # ---- remaining steps (T is tiny & static -> unrolled Python loop). ----
    for t in range(1, T):
        xc = x_ref[t, 0].astype(jnp.float32)
        yc = x_ref[t, 1].astype(jnp.float32)
        pre0 = xc * w00 + yc * w01 + h0 * u00 + h1 * u01 + b0
        pre1 = xc * w10 + yc * w11 + h0 * u10 + h1 * u11 + b1
        h0 = jnp.tanh(pre0)
        h1 = jnp.tanh(pre1)

    out_ref[0] = h0.astype(out_ref.dtype)
    out_ref[1] = h1.astype(out_ref.dtype)


def encoder_forward(x_tcb, w_ih, b_ih, w_hh, b_hh, *,
                    input_dtype=jnp.float32, out_dtype=jnp.float32,
                    strip_padding=True):
    """Encoder forward on the lane-major layout.

    x_tcb: (T, 2, B) float — time-step, coordinate (x/y), batch on lanes.
    Returns (2, B) `out_dtype` — final hidden state per batch element.

    input_dtype=jnp.bfloat16 halves HBM read traffic (kernel upcasts to f32 for compute);
    numerics then diverge slightly from the f32/f64 reference.
    """
    T, C, B = x_tcb.shape
    assert C == 2

    # ---- Tile picker (review item 1 & v7x item 5). ----
    rows_needed = pl.cdiv(B, LANES)
    rows_up = _round_up(max(rows_needed, SUBLANES), SUBLANES)
    # At least 2 blocks (both v7x TensorCores busy) whenever there is enough work;
    # otherwise as many MAX_BLOCK_ROWS-sized blocks as needed, balanced to minimize padding.
    min_blocks = 2 if rows_up >= 2 * SUBLANES else 1
    n_blocks = max(pl.cdiv(rows_up, MAX_BLOCK_ROWS), min_blocks)
    rblk = _round_up(pl.cdiv(rows_up, n_blocks), SUBLANES)
    rows = n_blocks * rblk
    b_pad = rows * LANES

    if b_pad != B:
        x_tcb = jnp.pad(x_tcb, ((0, 0), (0, 0), (0, b_pad - B)))

    # Free, contiguous reshape: (T, 2, B_pad) -> (T, 2, rows, 128).
    x_k = x_tcb.reshape(T, 2, rows, LANES).astype(input_dtype)

    # Flat scalar parameter vector for SMEM (1-D to avoid SMEM 2-D padding blowup);
    # biases pre-combined since both are always added each step.
    params = jnp.concatenate(
        [w_ih.reshape(-1), w_hh.reshape(-1), (b_ih + b_hh).reshape(-1)]
    ).astype(jnp.float32)

    # VMEM budget derived from actual block sizes (double-buffered in/out) + slack.
    x_block_bytes = T * 2 * rblk * LANES * jnp.dtype(input_dtype).itemsize
    out_block_bytes = 2 * rblk * LANES * jnp.dtype(out_dtype).itemsize
    vmem_limit = int(min(max(2 * (x_block_bytes + out_block_bytes) + (4 << 20), 16 << 20),
                         64 << 20))

    out = pl.pallas_call(
        encoder_kernel,
        out_shape=jax.ShapeDtypeStruct((2, rows, LANES), out_dtype),
        grid=(n_blocks,),
        in_specs=[
            pl.BlockSpec((T, 2, rblk, LANES), lambda r: (0, 0, r, 0)),   # x tile (VMEM)
            pl.BlockSpec(memory_space=pltpu.MemorySpace.SMEM),           # params (SMEM)
        ],
        out_specs=pl.BlockSpec((2, rblk, LANES), lambda r: (0, r, 0)),
        compiler_params=pltpu.CompilerParams(
            dimension_semantics=("parallel",),   # batch blocks independent
            vmem_limit_bytes=vmem_limit,
        ),
    )(x_k, params)

    out = out.reshape(2, b_pad)
    if strip_padding and b_pad != B:
        out = out[:, :B]          # NOTE: materializes a copy; skip if caller tolerates padding
    return out


def encoder_forward_btc(x_btc, w_ih, b_ih, w_hh, b_hh, **kw):
    """Compatibility wrapper for the PyTorch (B, T, 2) layout -> (B, 2).

    NOTE: the two transposes each cost a full HBM pass that can exceed the kernel's own
    runtime; prefer producing data in the lane-major (T, 2, B) layout and calling
    encoder_forward directly.
    """
    x_tcb = jnp.transpose(x_btc, (1, 2, 0))
    out = encoder_forward(x_tcb, w_ih, b_ih, w_hh, b_hh, **kw)   # (2, B)
    return out.T


def encoder_reference(x_tcb, w_ih, b_ih, w_hh, b_hh):
    """Pure-JAX reference mirroring the PyTorch recurrence (lane-major layout)."""
    T = x_tcb.shape[0]
    B = x_tcb.shape[2]
    h = jnp.zeros((2, B), jnp.float32)
    for t in range(T):
        pt = x_tcb[t].astype(jnp.float32)        # (2, B)
        i = w_ih @ pt + b_ih[:, None]            # (2, B)
        r = w_hh @ h + b_hh[:, None]             # (2, B)
        h = jnp.tanh(i + r)
    return h                                      # (2, B)


if __name__ == "__main__":
    # Parameters exactly as in the module's __init__ (cast to f32 for TPU).
    w_ih = jnp.array([[0.6627, -0.4245], [0.5373, 0.2294]], dtype=jnp.float32)
    b_ih = jnp.array([0.4954, 0.6533], dtype=jnp.float32)
    w_hh = jnp.array([[-0.4015, -0.5385], [-0.1956, -0.6835]], dtype=jnp.float32)
    b_hh = jnp.array([-0.3565, -0.2904], dtype=jnp.float32)

    key = jax.random.PRNGKey(0)
    T = 2

    # Case 1: small batch (exercises the pad/strip path, single-block grid).
    B1 = 300
    x1 = jax.random.normal(key, (T, 2, B1), dtype=jnp.float32)
    out1 = jax.block_until_ready(encoder_forward(x1, w_ih, b_ih, w_hh, b_hh))
    ref1 = encoder_reference(x1, w_ih, b_ih, w_hh, b_hh)
    np.testing.assert_allclose(np.asarray(out1), np.asarray(ref1), rtol=1e-5, atol=1e-5)

    # Case 2: larger (non-power-of-two) batch -> multi-block grid via the new tile picker.
    B2 = 3000
    x2 = jax.random.normal(jax.random.PRNGKey(1), (T, 2, B2), dtype=jnp.float32)
    out2 = jax.block_until_ready(encoder_forward(x2, w_ih, b_ih, w_hh, b_hh))
    ref2 = encoder_reference(x2, w_ih, b_ih, w_hh, b_hh)
    np.testing.assert_allclose(np.asarray(out2), np.asarray(ref2), rtol=1e-5, atol=1e-5)

    # Case 3: opt-in bf16 input path (half the HBM read traffic); loose tolerance.
    out_bf16 = jax.block_until_ready(
        encoder_forward(x2, w_ih, b_ih, w_hh, b_hh, input_dtype=jnp.bfloat16))
    np.testing.assert_allclose(np.asarray(out_bf16), np.asarray(ref2), rtol=5e-2, atol=5e-2)

    # Case 4: PyTorch-layout compatibility wrapper (B, T, 2) -> (B, 2).
    x_btc = jnp.transpose(x1, (2, 0, 1))
    out_btc = jax.block_until_ready(encoder_forward_btc(x_btc, w_ih, b_ih, w_hh, b_hh))
    np.testing.assert_allclose(np.asarray(out_btc), np.asarray(ref1.T), rtol=1e-5, atol=1e-5)

    print("KERNEL_OK")
</pallas_src>

<mosaic_0001>
module attributes {stable_mosaic.version = 11 : i64} {
  func.func @encoder_kernel(%arg0: i32, %arg1: memref<2x2x8x128xf32, #tpu.memory_space<vmem>>, %arg2: memref<10xf32, #tpu.memory_space<smem>>, %arg3: memref<2x8x128xf32, #tpu.memory_space<vmem>>) attributes {dimension_semantics = [#tpu.dimension_semantics<parallel>], iteration_bounds = array<i64: 1>, scalar_prefetch = 0 : i64, scratch_operands = 0 : i64, tpu.core_type = #tpu.core_type<tc>, window_params = [{transform_indices = @transform_0, window_bounds = array<i64: 2, 2, 8, 128>}, {transform_indices = @transform_1, window_bounds = array<i64: 10>}, {transform_indices = @transform_2, window_bounds = array<i64: 2, 8, 128>}]} {
    %c0 = arith.constant 0 : index
    %0 = memref.load %arg2[%c0] : memref<10xf32, #tpu.memory_space<smem>>
    %c1 = arith.constant 1 : index
    %1 = memref.load %arg2[%c1] : memref<10xf32, #tpu.memory_space<smem>>
    %c2 = arith.constant 2 : index
    %2 = memref.load %arg2[%c2] : memref<10xf32, #tpu.memory_space<smem>>
    %c3 = arith.constant 3 : index
    %3 = memref.load %arg2[%c3] : memref<10xf32, #tpu.memory_space<smem>>
    %c4 = arith.constant 4 : index
    %4 = memref.load %arg2[%c4] : memref<10xf32, #tpu.memory_space<smem>>
    %c5 = arith.constant 5 : index
    %5 = memref.load %arg2[%c5] : memref<10xf32, #tpu.memory_space<smem>>
    %c6 = arith.constant 6 : index
    %6 = memref.load %arg2[%c6] : memref<10xf32, #tpu.memory_space<smem>>
    %c7 = arith.constant 7 : index
    %7 = memref.load %arg2[%c7] : memref<10xf32, #tpu.memory_space<smem>>
    %c8 = arith.constant 8 : index
    %8 = memref.load %arg2[%c8] : memref<10xf32, #tpu.memory_space<smem>>
    %c9 = arith.constant 9 : index
    %9 = memref.load %arg2[%c9] : memref<10xf32, #tpu.memory_space<smem>>
    %c0_0 = arith.constant 0 : index
    %c0_1 = arith.constant 0 : index
    %c0_2 = arith.constant 0 : index
    %c0_3 = arith.constant 0 : index
    %10 = vector.load %arg1[%c0_0, %c0_1, %c0_2, %c0_3] : memref<2x2x8x128xf32, #tpu.memory_space<vmem>>, vector<1x1x8x128xf32>
    %11 = vector.shape_cast %10 : vector<1x1x8x128xf32> to vector<8x128xf32>
    %c0_4 = arith.constant 0 : index
    %c1_5 = arith.constant 1 : index
    %c0_6 = arith.constant 0 : index
    %c0_7 = arith.constant 0 : index
    %12 = vector.load %arg1[%c0_4, %c1_5, %c0_6, %c0_7] : memref<2x2x8x128xf32, #tpu.memory_space<vmem>>, vector<1x1x8x128xf32>
    %13 = vector.shape_cast %12 : vector<1x1x8x128xf32> to vector<8x128xf32>
    %14 = vector.broadcast %0 : f32 to vector<8x128xf32>
    %15 = arith.mulf %11, %14 : vector<8x128xf32>
    %16 = vector.broadcast %1 : f32 to vector<8x128xf32>
    %17 = arith.mulf %13, %16 : vector<8x128xf32>
    %18 = arith.addf %15, %17 : vector<8x128xf32>
    %19 = vector.broadcast %8 : f32 to vector<8x128xf32>
    %20 = arith.addf %18, %19 : vector<8x128xf32>
    %21 = math.tanh %20 : vector<8x128xf32>
    %22 = vector.broadcast %2 : f32 to vector<8x128xf32>
    %23 = arith.mulf %11, %22 : vector<8x128xf32>
    %24 = vector.broadcast %3 : f32 to vector<8x128xf32>
    %25 = arith.mulf %13, %24 : vector<8x128xf32>
    %26 = arith.addf %23, %25 : vector<8x128xf32>
    %27 = vector.broadcast %9 : f32 to vector<8x128xf32>
    %28 = arith.addf %26, %27 : vector<8x128xf32>
    %29 = math.tanh %28 : vector<8x128xf32>
    %c1_8 = arith.constant 1 : index
    %c0_9 = arith.constant 0 : index
    %c0_10 = arith.constant 0 : index
    %c0_11 = arith.constant 0 : index
    %30 = vector.load %arg1[%c1_8, %c0_9, %c0_10, %c0_11] : memref<2x2x8x128xf32, #tpu.memory_space<vmem>>, vector<1x1x8x128xf32>
    %31 = vector.shape_cast %30 : vector<1x1x8x128xf32> to vector<8x128xf32>
    %c1_12 = arith.constant 1 : index
    %c1_13 = arith.constant 1 : index
    %c0_14 = arith.constant 0 : index
    %c0_15 = arith.constant 0 : index
    %32 = vector.load %arg1[%c1_12, %c1_13, %c0_14, %c0_15] : memref<2x2x8x128xf32, #tpu.memory_space<vmem>>, vector<1x1x8x128xf32>
    %33 = vector.shape_cast %32 : vector<1x1x8x128xf32> to vector<8x128xf32>
    %34 = vector.broadcast %0 : f32 to vector<8x128xf32>
    %35 = arith.mulf %31, %34 : vector<8x128xf32>
    %36 = vector.broadcast %1 : f32 to vector<8x128xf32>
    %37 = arith.mulf %33, %36 : vector<8x128xf32>
    %38 = arith.addf %35, %37 : vector<8x128xf32>
    %39 = vector.broadcast %4 : f32 to vector<8x128xf32>
    %40 = arith.mulf %21, %39 : vector<8x128xf32>
    %41 = arith.addf %38, %40 : vector<8x128xf32>
    %42 = vector.broadcast %5 : f32 to vector<8x128xf32>
    %43 = arith.mulf %29, %42 : vector<8x128xf32>
    %44 = arith.addf %41, %43 : vector<8x128xf32>
    %45 = vector.broadcast %8 : f32 to vector<8x128xf32>
    %46 = arith.addf %44, %45 : vector<8x128xf32>
    %47 = vector.broadcast %2 : f32 to vector<8x128xf32>
    %48 = arith.mulf %31, %47 : vector<8x128xf32>
    %49 = vector.broadcast %3 : f32 to vector<8x128xf32>
    %50 = arith.mulf %33, %49 : vector<8x128xf32>
    %51 = arith.addf %48, %50 : vector<8x128xf32>
    %52 = vector.broadcast %6 : f32 to vector<8x128xf32>
    %53 = arith.mulf %21, %52 : vector<8x128xf32>
    %54 = arith.addf %51, %53 : vector<8x128xf32>
    %55 = vector.broadcast %7 : f32 to vector<8x128xf32>
    %56 = arith.mulf %29, %55 : vector<8x128xf32>
    %57 = arith.addf %54, %56 : vector<8x128xf32>
    %58 = vector.broadcast %9 : f32 to vector<8x128xf32>
    %59 = arith.addf %57, %58 : vector<8x128xf32>
    %60 = math.tanh %46 : vector<8x128xf32>
    %61 = math.tanh %59 : vector<8x128xf32>
    %c0_16 = arith.constant 0 : index
    %c0_17 = arith.constant 0 : index
    %c0_18 = arith.constant 0 : index
    %62 = vector.load %arg3[%c0_16, %c0_17, %c0_18] : memref<2x8x128xf32, #tpu.memory_space<vmem>>, vector<1x8x128xf32>
    %63 = vector.shape_cast %62 : vector<1x8x128xf32> to vector<8x128xf32>
    %64 = vector.shape_cast %60 : vector<8x128xf32> to vector<1x8x128xf32>
    tpu.vector_store %arg3[%c0_16, %c0_17, %c0_18], %64 {strides = array<i32>} : memref<2x8x128xf32, #tpu.memory_space<vmem>>, vector<1x8x128xf32>,
    %c1_19 = arith.constant 1 : index
    %c0_20 = arith.constant 0 : index
    %c0_21 = arith.constant 0 : index
    %65 = vector.load %arg3[%c1_19, %c0_20, %c0_21] : memref<2x8x128xf32, #tpu.memory_space<vmem>>, vector<1x8x128xf32>
    %66 = vector.shape_cast %65 : vector<1x8x128xf32> to vector<8x128xf32>
    %67 = vector.shape_cast %61 : vector<8x128xf32> to vector<1x8x128xf32>
    tpu.vector_store %arg3[%c1_19, %c0_20, %c0_21], %67 {strides = array<i32>} : memref<2x8x128xf32, #tpu.memory_space<vmem>>, vector<1x8x128xf32>,
    return
  }
  func.func @transform_0(%arg0: i32) -> (i32, i32, i32, i32) {
    %c0_i32 = arith.constant 0 : i32
    %c0_i32_0 = arith.constant 0 : i32
    %c0_i32_1 = arith.constant 0 : i32
    %c0_i32_2 = arith.constant 0 : i32
    return %c0_i32, %c0_i32_0, %arg0, %c0_i32_1 : i32, i32, i32, i32
  }
  func.func @transform_1(%arg0: i32) -> i32 {
    %c0_i32 = arith.constant 0 : i32
    %c0_i32_0 = arith.constant 0 : i32
    return %c0_i32 : i32
  }
  func.func @transform_2(%arg0: i32) -> (i32, i32, i32) {
    %c0_i32 = arith.constant 0 : i32
    %c0_i32_0 = arith.constant 0 : i32
    %c0_i32_1 = arith.constant 0 : i32
    return %c0_i32, %arg0, %c0_i32_0 : i32, i32, i32
  }
}

</mosaic_0001>

<llo_original>
// kernel: tpu_custom_call.1
$region0: #{tpu_custom_call.1}
  #allocation0 [shape = 'u32[]', space=smem, size = 0x4, offset = 0x4, fixed_abs, tag = 'smem constant byte address 0x4 - core index']
  #allocation1 [shape = 'u32[72,128]{1,0:T(1,128)}', space=vmem, size = 0x9000, scoped, tag = 'internal scratch']
  %s0 = inlined_call_operand.hbm [shape: f32[2,2,8,128], index: 0, kind: input, shape index: {}]
  %s1 = inlined_call_operand.hbm [shape: f32[10], index: 1, kind: input, shape index: {}]
  %s2 = inlined_call_operand.hbm [shape: f32[2,8,128], index: 2, kind: output, shape index: {}]
  %s3 = sld [smem:[#allocation0]]
  $region26: #{tpu_custom_call.1} parent=0
    _
  %s5 = ssub.s32 1, %s3
  %s6 = scalar_select 0, %s5, %s3
  $region1: #{tpu_custom_call.1} parent=0
    #allocation2 [shape = 'u8[16384]{0}', space=vmem, size = 0x4000, scoped, tag = 'input window, operand 0, single buffered']
    #allocation3 [shape = 's32[1]{0}', space=sflag, size = 0x4, scoped, tag = 'scoped memory for tpu_custom_call.1']
    #allocation4 [shape = 's32[1]{0}', space=sflag, size = 0x4, scoped, tag = 'scoped memory for tpu_custom_call.1']
    #allocation5 [shape = 's32[1]{0}', space=sflag, size = 0x4, scoped, tag = 'scoped memory for tpu_custom_call.1']
    #allocation6 [shape = 'u8[512]{0}', space=smem, size = 0x200, scoped, tag = 'input window, operand 1, single buffered']
    #allocation7 [shape = 'u8[8192]{0}', space=vmem, size = 0x2000, scoped, tag = 'output window, operand 0, single buffered']
    %7 = vsyncpa [#allocation3], 0
    %8 = vsyncpa [#allocation5], 0
    %9 = vsyncpa [#allocation4], 0
    // Predicated region
    $region2: #{tpu_custom_call.1} parent=1 // pred_check
      _
    $region3: #{tpu_custom_call.1} parent=1 // pred_check_branch
      %11 = sbr.rel (0) target = $region5
    $region4: #{tpu_custom_call.1} parent=1 // pred_region
      %13 = vsyncadd [#allocation3], 0
      %s14 = sshll.u32 %s0, 4
      %s15 = int_to_ptr.hbm [resolvable:$true] %s14
      %s16 = sshll.u32 [#allocation2], 4
      %s17 = int_to_ptr.vmem [resolvable:$true] %s16
      %22 = dma.hbm_to_vmem [thread:$0]  %s15, 512, %s17, [#allocation3], 128, 128, 8
    $region5: #{tpu_custom_call.1} parent=1 // pred_fallthru
      _
    // Predicated region
    $region6: #{tpu_custom_call.1} parent=1 // pred_check
      _
    $region7: #{tpu_custom_call.1} parent=1 // pred_check_branch
      %24 = sbr.rel (0) target = $region9
    $region8: #{tpu_custom_call.1} parent=1 // pred_region
      %26 = vsyncadd [#allocation5], 0
      %s28 = sshll.u32 %s1, 4
      %s29 = int_to_ptr.hbm [resolvable:$true] %s28
      %31 = dma.hbm_to_smem %s29, 16, [#allocation6], [#allocation5]
    $region9: #{tpu_custom_call.1} parent=1 // pred_fallthru
      _
    // Predicated region
    $region10: #{tpu_custom_call.1} parent=1 // pred_check
      _
    $region11: #{tpu_custom_call.1} parent=1 // pred_check_branch
      %33 = sbr.rel (0) target = $region13
    $region12: #{tpu_custom_call.1} parent=1 // pred_region
      %35 = dma.done [#allocation3], 512
    $region13: #{tpu_custom_call.1} parent=1 // pred_fallthru
      _
    // Predicated region
    $region14: #{tpu_custom_call.1} parent=1 // pred_check
      _
    $region15: #{tpu_custom_call.1} parent=1 // pred_check_branch
      %37 = sbr.rel (0) target = $region17
    $region16: #{tpu_custom_call.1} parent=1 // pred_region
      %39 = dma.done [#allocation5], 16
    $region17: #{tpu_custom_call.1} parent=1 // pred_fallthru
      _
    %40 = sfence
    %s41 = sld [smem:[#allocation6]]
    %s42 = sld [smem:[#allocation6 + $0x1]]
    %s43 = sld [smem:[#allocation6 + $0x2]]
    %s44 = sld [smem:[#allocation6 + $0x3]]
    %s45 = sld [smem:[#allocation6 + $0x4]]
    %s46 = sld [smem:[#allocation6 + $0x5]]
    %s47 = sld [smem:[#allocation6 + $0x6]]
    %s48 = sld [smem:[#allocation6 + $0x7]]
    %s49 = sld [smem:[#allocation6 + $0x8]]
    %s50 = sld [smem:[#allocation6 + $0x9]]
    %v51 = vld [vmem:[#allocation2] sm:$0xff]
    %s52 = scalar_lea.vmem [#allocation2], 8
    %v53 = vld [vmem:[%s52] sm:$0xff]
    %v54 = vstv %s41
    %v55 = vmul.f32 %v51, %v54
    %v56 = vstv %s42
    %v57 = vmul.f32 %v53, %v56
    %v58 = vadd.f32 %v55, %v57
    %v59 = vstv %s49
    %v60 = vadd.f32 %v58, %v59
    %v61 = vtanh.pop %v60
    %v62 = vstv %s43
    %v63 = vmul.f32 %v51, %v62
    %v64 = vstv %s44
    %v65 = vmul.f32 %v53, %v64
    %v66 = vadd.f32 %v63, %v65
    %v67 = vstv %s50
    %v68 = vadd.f32 %v66, %v67
    %v69 = vtanh.pop %v68
    %s70 = scalar_lea.vmem [#allocation2], 16
    %v71 = vld [vmem:[%s70] sm:$0xff]
    %s72 = scalar_lea.vmem [#allocation2], 24
    %v73 = vld [vmem:[%s72] sm:$0xff]
    %v74 = vmul.f32 %v71, %v54
    %v75 = vmul.f32 %v73, %v56
    %v76 = vadd.f32 %v74, %v75
    %v77 = vstv %s45
    %v78 = vmul.f32 %v61, %v77
    %v79 = vadd.f32 %v76, %v78
    %v80 = vstv %s46
    %v81 = vmul.f32 %v69, %v80
    %v82 = vadd.f32 %v79, %v81
    %v83 = vadd.f32 %v82, %v59
    %v84 = vmul.f32 %v71, %v62
    %v85 = vmul.f32 %v73, %v64
    %v86 = vadd.f32 %v84, %v85
    %v87 = vstv %s47
    %v88 = vmul.f32 %v61, %v87
    %v89 = vadd.f32 %v86, %v88
    %v90 = vstv %s48
    %v91 = vmul.f32 %v69, %v90
    %v92 = vadd.f32 %v89, %v91
    %v93 = vadd.f32 %v92, %v67
    %v94 = vtanh.pop %v83
    %v95 = vtanh.pop %v93
    %96 = vst [vmem:[#allocation7] sm:$0xff] %v94
    %s97 = scalar_lea.vmem [#allocation7], 8
    %98 = vst [vmem:[%s97] sm:$0xff] %v95
    // Predicated region
    $region18: #{tpu_custom_call.1} parent=1 // pred_check
      _
    $region19: #{tpu_custom_call.1} parent=1 // pred_check_branch
      %100 = sbr.rel (0) target = $region21
    $region20: #{tpu_custom_call.1} parent=1 // pred_region
      %102 = vsyncadd [#allocation4], 0
      %s103 = sshll.u32 [#allocation7], 4
      %s104 = int_to_ptr.vmem [resolvable:$true] %s103
      %s105 = sshll.u32 %s2, 4
      %s106 = int_to_ptr.hbm [resolvable:$true] %s105
      %111 = dma.vmem_to_hbm [thread:$0]  %s104, 256, %s106, [#allocation4], 128, 128, 8
    $region21: #{tpu_custom_call.1} parent=1 // pred_fallthru
      _
    // Predicated region
    $region22: #{tpu_custom_call.1} parent=1 // pred_check
      _
    $region23: #{tpu_custom_call.1} parent=1 // pred_check_branch
      %113 = sbr.rel (0) target = $region25
    $region24: #{tpu_custom_call.1} parent=1 // pred_region
      %115 = dma.done [#allocation4], 256
    $region25: #{tpu_custom_call.1} parent=1 // pred_fallthru
      _
    %116 = vsyncpa [#allocation3], 1
    %117 = vsyncpa [#allocation4], 1
    %118 = vsyncpa [#allocation5], 1

</llo_original>
